<compile_context>
chip_gen: v6e
topology: v6e:2x2x1
jax: 0.10.0
libtpu: 0.0.40
codegen_flags: <defaults>
</compile_context>

<pallas_src>
import jax
import jax.numpy as jnp
from jax import lax
from jax.experimental import pallas as pl
from jax.experimental.pallas import tpu as pltpu


def _linear_kernel(x_ref, w_ref, b_ref, o_ref):
    # x_ref: (TM, K), w_ref: (N, K), b_ref: (1, N), o_ref: (TM, N)
    # Contract K against K (nn.Linear layout) directly on the MXU; f32 accumulate.
    acc = lax.dot_general(
        x_ref[...],
        w_ref[...],
        dimension_numbers=(((1,), (1,)), ((), ())),
        preferred_element_type=jnp.float32,
    )
    # Single fused bias-add + cast + store (VPU epilogue, one vector store).
    o_ref[...] = (acc + b_ref[...]).astype(o_ref.dtype)


def classifier_forward(x, weight, bias, *, block_batch=256):
    """x: (B, in_dim); weight: (num_classes, in_dim) as in nn.Linear; bias: (num_classes,)."""
    B, in_dim = x.shape
    num_classes, _ = weight.shape
    b2d = bias.reshape(1, num_classes)  # 2-D so all kernel operands are >= 2-D

    # Small batch: one grid step (custom-call/DMA latency dominates; never tile K or N).
    # Large batch: stream x in (TM, in_dim) tiles, keep weight/bias resident across the grid.
    tm = B if B <= block_batch else block_batch
    grid = (pl.cdiv(B, tm),)

    x_bytes = B * in_dim * jnp.dtype(x.dtype).itemsize
    w_bytes = weight.size * jnp.dtype(weight.dtype).itemsize
    b_bytes = bias.size * jnp.dtype(bias.dtype).itemsize
    o_bytes = B * num_classes * jnp.dtype(x.dtype).itemsize
    cost = pl.CostEstimate(
        flops=2 * B * in_dim * num_classes,
        transcendentals=0,
        bytes_accessed=x_bytes + w_bytes + b_bytes + o_bytes,
    )

    return pl.pallas_call(
        _linear_kernel,
        out_shape=jax.ShapeDtypeStruct((B, num_classes), x.dtype),
        grid_spec=pl.GridSpec(
            grid=grid,
            in_specs=[
                # x tiles stream along the batch axis.
                pl.BlockSpec((tm, in_dim), lambda i: (i, 0)),
                # Weight and bias are grid-invariant (block index fixed) -> loaded once.
                pl.BlockSpec((num_classes, in_dim), lambda i: (0, 0)),
                pl.BlockSpec((1, num_classes), lambda i: (0, 0)),
            ],
            out_specs=pl.BlockSpec((tm, num_classes), lambda i: (i, 0)),
        ),
        compiler_params=pltpu.CompilerParams(
            # Batch axis is embarrassingly parallel -> megacore sharding on v7x.
            dimension_semantics=("parallel",),
        ),
        cost_estimate=cost,
    )(x, weight, b2d)


if __name__ == "__main__":
    # Shapes consistent with the module's forward: (batch, feat_dim).
    batch, in_dim, num_classes = 2, 2048, 31

    key = jax.random.PRNGKey(0)
    kx, kw, kb = jax.random.split(key, 3)

    x = jax.random.normal(kx, (batch, in_dim), dtype=jnp.float32)
    # Deterministic init mimicking nn.Linear's uniform(-1/sqrt(in_dim), 1/sqrt(in_dim)).
    bound = 1.0 / jnp.sqrt(jnp.float32(in_dim))
    weight = jax.random.uniform(kw, (num_classes, in_dim), jnp.float32, -bound, bound)
    bias = jax.random.uniform(kb, (num_classes,), jnp.float32, -bound, bound)

    out = classifier_forward(x, weight, bias)
    jax.block_until_ready(out)

    # Correctness check against plain-JAX reference.
    ref = x @ weight.T + bias
    assert out.shape == (batch, num_classes)
    assert jnp.allclose(out, ref, atol=1e-4, rtol=1e-4)

    print("KERNEL_OK")
</pallas_src>

<mosaic_0001>
module attributes {stable_mosaic.version = 11 : i64} {
  func.func @_linear_kernel(%arg0: i32, %arg1: memref<2x2048xf32, #tpu.memory_space<vmem>>, %arg2: memref<31x2048xf32, #tpu.memory_space<vmem>>, %arg3: memref<1x31xf32, #tpu.memory_space<vmem>>, %arg4: memref<2x31xf32, #tpu.memory_space<vmem>>) attributes {dimension_semantics = [#tpu.dimension_semantics<parallel>], iteration_bounds = array<i64: 1>, scalar_prefetch = 0 : i64, scratch_operands = 0 : i64, tpu.core_type = #tpu.core_type<tc>, window_params = [{transform_indices = @transform_0, window_bounds = array<i64: 2, 2048>}, {pipeline_mode = #tpu.pipeline_mode<synchronous>, transform_indices = @transform_1, window_bounds = array<i64: 31, 2048>}, {pipeline_mode = #tpu.pipeline_mode<synchronous>, transform_indices = @transform_2, window_bounds = array<i64: 1, 31>}, {transform_indices = @transform_3, window_bounds = array<i64: 2, 31>}]} {
    %c0 = arith.constant 0 : index
    %c0_0 = arith.constant 0 : index
    %0 = vector.load %arg1[%c0, %c0_0] : memref<2x2048xf32, #tpu.memory_space<vmem>>, vector<2x2048xf32>
    %c0_1 = arith.constant 0 : index
    %c0_2 = arith.constant 0 : index
    %1 = vector.load %arg2[%c0_1, %c0_2] : memref<31x2048xf32, #tpu.memory_space<vmem>>, vector<31x2048xf32>
    %cst = arith.constant dense<0.000000e+00> : vector<2x31xf32>
    %2 = tpu.matmul %0, %1, %cst {dimension_numbers = #tpu.dot_dimension_numbers<[1], [1], [0], [0], [0, 0, 1, 0], [], []>} : vector<2x2048xf32>, vector<31x2048xf32>, vector<2x31xf32> -> vector<2x31xf32>
    %c0_3 = arith.constant 0 : index
    %c0_4 = arith.constant 0 : index
    %3 = vector.load %arg3[%c0_3, %c0_4] : memref<1x31xf32, #tpu.memory_space<vmem>>, vector<1x31xf32>
    %4 = vector.broadcast %3 : vector<1x31xf32> to vector<2x31xf32>
    %5 = arith.addf %2, %4 : vector<2x31xf32>
    %c0_5 = arith.constant 0 : index
    %c0_6 = arith.constant 0 : index
    %6 = vector.load %arg4[%c0_5, %c0_6] : memref<2x31xf32, #tpu.memory_space<vmem>>, vector<2x31xf32>
    tpu.vector_store %arg4[%c0_5, %c0_6], %5 {strides = array<i32>} : memref<2x31xf32, #tpu.memory_space<vmem>>, vector<2x31xf32>,
    return
  }
  func.func @transform_0(%arg0: i32) -> (i32, i32) {
    %c0_i32 = arith.constant 0 : i32
    %c0_i32_0 = arith.constant 0 : i32
    return %arg0, %c0_i32 : i32, i32
  }
  func.func @transform_1(%arg0: i32) -> (i32, i32) {
    %c0_i32 = arith.constant 0 : i32
    %c0_i32_0 = arith.constant 0 : i32
    %c0_i32_1 = arith.constant 0 : i32
    return %c0_i32, %c0_i32_0 : i32, i32
  }
  func.func @transform_2(%arg0: i32) -> (i32, i32) {
    %c0_i32 = arith.constant 0 : i32
    %c0_i32_0 = arith.constant 0 : i32
    %c0_i32_1 = arith.constant 0 : i32
    return %c0_i32, %c0_i32_0 : i32, i32
  }
  func.func @transform_3(%arg0: i32) -> (i32, i32) {
    %c0_i32 = arith.constant 0 : i32
    %c0_i32_0 = arith.constant 0 : i32
    return %arg0, %c0_i32 : i32, i32
  }
}

</mosaic_0001>

<llo_original>
// kernel: tpu_custom_call.1
$region0: #{tpu_custom_call.1}
  #allocation0 [shape = 'u32[]', space=smem, size = 0x4, offset = 0x4, fixed_abs, tag = 'smem constant byte address 0x4 - core index']
  #allocation1 [shape = 'u32[144,128]{1,0:T(1,128)}', space=vmem, size = 0x12000, scoped, tag = 'internal scratch']
  %s0 = inlined_call_operand.hbm [shape: f32[2,2048], index: 0, kind: input, shape index: {}]
  %s1 = inlined_call_operand.hbm [shape: f32[31,2048], index: 1, kind: input, shape index: {}]
  %s2 = inlined_call_operand.vmem [shape: f32[1,31], index: 2, kind: input, shape index: {}]
  %s3 = inlined_call_operand.hbm [shape: f32[2,31], index: 3, kind: output, shape index: {}]
  %s4 = sld [smem:[#allocation0]]
  $region30: #{tpu_custom_call.1} parent=0
    _
  %s6 = ssub.s32 1, %s4
  %s7 = scalar_select 0, %s6, %s4
  $region1: #{tpu_custom_call.1} parent=0
    #allocation2 [shape = 'u8[16384]{0}', space=vmem, size = 0x4000, scoped, tag = 'input window, operand 0, single buffered']
    #allocation3 [shape = 's32[1]{0}', space=sflag, size = 0x4, scoped, tag = 'scoped memory for tpu_custom_call.1']
    #allocation4 [shape = 's32[1]{0}', space=sflag, size = 0x4, scoped, tag = 'scoped memory for tpu_custom_call.1']
    #allocation5 [shape = 'u8[262144]{0}', space=vmem, size = 0x40000, scoped, tag = 'input window, operand 1, single buffered']
    #allocation6 [shape = 's32[1]{0}', space=sflag, size = 0x4, scoped, tag = 'scoped memory for tpu_custom_call.1']
    #allocation7 [shape = 'u8[1024]{0}', space=vmem, size = 0x400, scoped, tag = 'output window, operand 0, single buffered']
    %8 = vsyncpa [#allocation3], 0
    %9 = vsyncpa [#allocation6], 0
    %10 = vsyncpa [#allocation4], 0
    // Predicated region
    $region2: #{tpu_custom_call.1} parent=1 // pred_check
      _
    $region3: #{tpu_custom_call.1} parent=1 // pred_check_branch
      %12 = sbr.rel (0) target = $region5
    $region4: #{tpu_custom_call.1} parent=1 // pred_region
      %s14 = ssub.s32 512, 512
      %15 = vsyncadd [#allocation3], %s14
      %s17 = sshll.u32 [#allocation2], 4
      %s18 = int_to_ptr.vmem [resolvable:$true] %s17
      %20 = dma.hbm_to_vmem [thread:$0]  %s0, 512, %s18, [#allocation3]
    $region5: #{tpu_custom_call.1} parent=1 // pred_fallthru
      _
    // Predicated region
    $region6: #{tpu_custom_call.1} parent=1 // pred_check
      _
    $region7: #{tpu_custom_call.1} parent=1 // pred_check_branch
      %22 = sbr.rel (0) target = $region9
    $region8: #{tpu_custom_call.1} parent=1 // pred_region
      %s24 = ssub.s32 8192, 8192
      %25 = vsyncadd [#allocation6], %s24
      %s26 = sshll.u32 [#allocation5], 4
      %s27 = int_to_ptr.vmem [resolvable:$true] %s26
      %32 = dma.hbm_to_vmem [thread:$0]  %s1, 8192, %s27, [#allocation6], 2048, 2048, 128
    $region9: #{tpu_custom_call.1} parent=1 // pred_fallthru
      _
    // Predicated region
    $region10: #{tpu_custom_call.1} parent=1 // pred_check
      _
    $region11: #{tpu_custom_call.1} parent=1 // pred_check_branch
      %34 = sbr.rel (0) target = $region13
    $region12: #{tpu_custom_call.1} parent=1 // pred_region
      _
    $region13: #{tpu_custom_call.1} parent=1 // pred_fallthru
      _
    // Predicated region
    $region14: #{tpu_custom_call.1} parent=1 // pred_check
      _
    $region15: #{tpu_custom_call.1} parent=1 // pred_check_branch
      %36 = sbr.rel (0) target = $region17
    $region16: #{tpu_custom_call.1} parent=1 // pred_region
      %37 = dma.done [#allocation3], 512
    $region17: #{tpu_custom_call.1} parent=1 // pred_fallthru
      _
    // Predicated region
    $region18: #{tpu_custom_call.1} parent=1 // pred_check
      _
    $region19: #{tpu_custom_call.1} parent=1 // pred_check_branch
      %39 = sbr.rel (0) target = $region21
    $region20: #{tpu_custom_call.1} parent=1 // pred_region
      %40 = dma.done [#allocation6], 8192
    $region21: #{tpu_custom_call.1} parent=1 // pred_fallthru
      _
    %v41 = vld [vmem:[#allocation2] sm:$0xff]
    %v42 = vld [vmem:[#allocation2 + $0x8] sm:$0xff]
    %v43 = vld [vmem:[#allocation2 + $0x10] sm:$0xff]
    %v44 = vld [vmem:[#allocation2 + $0x18] sm:$0xff]
    %v45 = vld [vmem:[#allocation5] sm:$0xff]
    %v46 = vld [vmem:[#allocation5 + $0x8] sm:$0xff]
    %v47 = vld [vmem:[#allocation5 + $0x10] sm:$0xff]
    %v48 = vld [vmem:[#allocation5 + $0x18] sm:$0xff]
    %v49 = vld [vmem:[#allocation5 + $0x20] sm:$0xff]
    %v50 = vld [vmem:[#allocation5 + $0x28] sm:$0xff]
    %v51 = vld [vmem:[#allocation5 + $0x30] sm:$0xff]
    %v52 = vld [vmem:[#allocation5 + $0x38] sm:$0xff]
    %v53 = vld [vmem:[#allocation5 + $0x40] sm:$0xff]
    %v54 = vld [vmem:[#allocation5 + $0x48] sm:$0xff]
    %v55 = vld [vmem:[#allocation5 + $0x50] sm:$0xff]
    %v56 = vld [vmem:[#allocation5 + $0x58] sm:$0xff]
    %v57 = vld [vmem:[#allocation5 + $0x60] sm:$0xff]
    %v58 = vld [vmem:[#allocation5 + $0x68] sm:$0xff]
    %v59 = vld [vmem:[#allocation5 + $0x70] sm:$0xff]
    %v60 = vld [vmem:[#allocation5 + $0x78] sm:$0xff]
    %v61 = vld [vmem:[#allocation5 + $0x80] sm:$0xff]
    %v62 = vld [vmem:[#allocation5 + $0x88] sm:$0xff]
    %v63 = vld [vmem:[#allocation5 + $0x90] sm:$0xff]
    %v64 = vld [vmem:[#allocation5 + $0x98] sm:$0xff]
    %v65 = vld [vmem:[#allocation5 + $0xa0] sm:$0xff]
    %v66 = vld [vmem:[#allocation5 + $0xa8] sm:$0xff]
    %v67 = vld [vmem:[#allocation5 + $0xb0] sm:$0xff]
    %v68 = vld [vmem:[#allocation5 + $0xb8] sm:$0xff]
    %v69 = vld [vmem:[#allocation5 + $0xc0] sm:$0xff]
    %v70 = vld [vmem:[#allocation5 + $0xc8] sm:$0xff]
    %v71 = vld [vmem:[#allocation5 + $0xd0] sm:$0xff]
    %v72 = vld [vmem:[#allocation5 + $0xd8] sm:$0xff]
    %v73 = vld [vmem:[#allocation5 + $0xe0] sm:$0xff]
    %v74 = vld [vmem:[#allocation5 + $0xe8] sm:$0xff]
    %v75 = vld [vmem:[#allocation5 + $0xf0] sm:$0xff]
    %v76 = vld [vmem:[#allocation5 + $0xf8] sm:$0xff]
    %v77 = vld [vmem:[#allocation5 + $0x100] sm:$0xff]
    %v78 = vld [vmem:[#allocation5 + $0x108] sm:$0xff]
    %v79 = vld [vmem:[#allocation5 + $0x110] sm:$0xff]
    %v80 = vld [vmem:[#allocation5 + $0x118] sm:$0xff]
    %v81 = vld [vmem:[#allocation5 + $0x120] sm:$0xff]
    %v82 = vld [vmem:[#allocation5 + $0x128] sm:$0xff]
    %v83 = vld [vmem:[#allocation5 + $0x130] sm:$0xff]
    %v84 = vld [vmem:[#allocation5 + $0x138] sm:$0xff]
    %v85 = vld [vmem:[#allocation5 + $0x140] sm:$0xff]
    %v86 = vld [vmem:[#allocation5 + $0x148] sm:$0xff]
    %v87 = vld [vmem:[#allocation5 + $0x150] sm:$0xff]
    %v88 = vld [vmem:[#allocation5 + $0x158] sm:$0xff]
    %v89 = vld [vmem:[#allocation5 + $0x160] sm:$0xff]
    %v90 = vld [vmem:[#allocation5 + $0x168] sm:$0xff]
    %v91 = vld [vmem:[#allocation5 + $0x170] sm:$0xff]
    %v92 = vld [vmem:[#allocation5 + $0x178] sm:$0xff]
    %v93 = vld [vmem:[#allocation5 + $0x180] sm:$0x7f]
    %v94 = vld [vmem:[#allocation5 + $0x188] sm:$0x7f]
    %v95 = vld [vmem:[#allocation5 + $0x190] sm:$0x7f]
    %v96 = vld [vmem:[#allocation5 + $0x198] sm:$0x7f]
    %v97 = vld [vmem:[#allocation5 + $0x1a0] sm:$0x7f]
    %v98 = vld [vmem:[#allocation5 + $0x1a8] sm:$0x7f]
    %v99 = vld [vmem:[#allocation5 + $0x1b0] sm:$0x7f]
    %v100 = vld [vmem:[#allocation5 + $0x1b8] sm:$0x7f]
    %v101 = vld [vmem:[#allocation5 + $0x1c0] sm:$0x7f]
    %v102 = vld [vmem:[#allocation5 + $0x1c8] sm:$0x7f]
    %v103 = vld [vmem:[#allocation5 + $0x1d0] sm:$0x7f]
    %v104 = vld [vmem:[#allocation5 + $0x1d8] sm:$0x7f]
    %v105 = vld [vmem:[#allocation5 + $0x1e0] sm:$0x7f]
    %v106 = vld [vmem:[#allocation5 + $0x1e8] sm:$0x7f]
    %v107 = vld [vmem:[#allocation5 + $0x1f0] sm:$0x7f]
    %v108 = vld [vmem:[#allocation5 + $0x1f8] sm:$0x7f]
    %v109 = vld [vmem:[%s2] sm:$0x1]
    %v111 = vlaneseq
    %v112 = vshrl.u32 %v111, 7
    %v113 = vsub.s32 0, %v112
    %v114 = vrot.slane %v109, %v113
    %v120 = vcombine.high %v41, %v41
    %v122 = vunpack.c.l.s4 1983009808
    %v123 = vunpack.c.0.s8 %v122
    %v124 = vlaneseq
    %v125 = vshrl.u32 %v124, 7
    %v126 = vsub.s32 %v123, %v125
    %v127 = vrot.slane %v41, %v126
    %v129 = vunpack.c.l.s4 1983009808
    %v130 = vunpack.c.0.s8 %v129
    %v131 = vlaneseq
    %v132 = vshrl.u32 %v131, 7
    %v133 = vsub.s32 %v130, %v132
    %v134 = vrot.slane %v120, %v133
    %v135 = vcombine.high %v127, %v127
    %v136 = vcombine.high %v134, %v134
    %v137 = vcombine.high %v42, %v42
    %v139 = vunpack.c.l.s4 1983009808
    %v140 = vunpack.c.0.s8 %v139
    %v141 = vlaneseq
    %v142 = vshrl.u32 %v141, 7
    %v143 = vsub.s32 %v140, %v142
    %v144 = vrot.slane %v42, %v143
    %v146 = vunpack.c.l.s4 1983009808
    %v147 = vunpack.c.0.s8 %v146
    %v148 = vlaneseq
    %v149 = vshrl.u32 %v148, 7
    %v150 = vsub.s32 %v147, %v149
    %v151 = vrot.slane %v137, %v150
    %v152 = vcombine.high %v144, %v144
    %v153 = vcombine.high %v151, %v151
    %v154 = vcombine.high %v43, %v43
    %v156 = vunpack.c.l.s4 1983009808
    %v157 = vunpack.c.0.s8 %v156
    %v158 = vlaneseq
    %v159 = vshrl.u32 %v158, 7
    %v160 = vsub.s32 %v157, %v159
    %v161 = vrot.slane %v43, %v160
    %v163 = vunpack.c.l.s4 1983009808
    %v164 = vunpack.c.0.s8 %v163
    %v165 = vlaneseq
    %v166 = vshrl.u32 %v165, 7
    %v167 = vsub.s32 %v164, %v166
    %v168 = vrot.slane %v154, %v167
    %v169 = vcombine.high %v161, %v161
    %v170 = vcombine.high %v168, %v168
    %v171 = vcombine.high %v44, %v44
    %v173 = vunpack.c.l.s4 1983009808
    %v174 = vunpack.c.0.s8 %v173
    %v175 = vlaneseq
    %v176 = vshrl.u32 %v175, 7
    %v177 = vsub.s32 %v174, %v176
    %v178 = vrot.slane %v44, %v177
    %v180 = vunpack.c.l.s4 1983009808
    %v181 = vunpack.c.0.s8 %v180
    %v182 = vlaneseq
    %v183 = vshrl.u32 %v182, 7
    %v184 = vsub.s32 %v181, %v183
    %v185 = vrot.slane %v171, %v184
    %v186 = vcombine.high %v178, %v178
    %v187 = vcombine.high %v185, %v185
    %204 = vmatprep.subr.mxu0 0.0
    %205 = vmatpush1.xpose.msra.mxu0 0.0
    %206 = vmatprep.subr.mxu0 0.0
    %207 = vmatpush1.xpose.msra.mxu0 0.0
    %208 = vmatprep.subr.mxu0 0.0
    %209 = vmatpush1.xpose.msra.mxu0 0.0
    %210 = vmatprep.subr.mxu0 0.0
    %211 = vmatpush1.xpose.msra.mxu0 0.0
    %212 = vmatprep.subr.mxu0 0.0
    %213 = vmatpush1.xpose.msra.mxu0 0.0
    %214 = vmatprep.subr.mxu0 0.0
    %215 = vmatpush1.xpose.msra.mxu0 0.0
    %216 = vmatprep.subr.mxu0 0.0
    %217 = vmatpush1.xpose.msra.mxu0 0.0
    %218 = vmatprep.subr.mxu0 0.0
    %219 = vmatpush1.xpose.msra.mxu0 0.0
    %220 = vmatprep.subr.mxu0 0.0
    %221 = vmatpush1.xpose.msra.mxu0 0.0
    %222 = vmatprep.subr.mxu0 0.0
    %223 = vmatpush1.xpose.msra.mxu0 0.0
    %224 = vmatprep.subr.mxu0 0.0
    %225 = vmatpush1.xpose.msra.mxu0 0.0
    %226 = vmatprep.subr.mxu0 0.0
    %227 = vmatpush1.xpose.msra.mxu0 0.0
    %228 = vmatprep.subr.mxu0 %v94
    %229 = vmatpush1.xpose.msra.mxu0 %v93
    %230 = vmatprep.subr.mxu0 %v78
    %231 = vmatpush1.xpose.msra.mxu0 %v77
    %232 = vmatprep.subr.mxu0 %v62
    %233 = vmatpush1.xpose.msra.mxu0 %v61
    %234 = vmatprep.subr.mxu0 %v46
    %235 = vmatpush1.xpose.msra.mxu0 %v45
    %236 = vmatprep.subr.mxu0 0.0
    %237 = vmatpush2.xpose.msra.mxu0 0.0
    %238 = vmatprep.subr.mxu0 0.0
    %239 = vmatpush2.xpose.msra.mxu0 0.0
    %240 = vmatprep.subr.mxu0 0.0
    %241 = vmatpush2.xpose.msra.mxu0 0.0
    %242 = vmatprep.subr.mxu0 0.0
    %243 = vmatpush2.xpose.msra.mxu0 0.0
    %244 = vmatprep.subr.mxu0 0.0
    %245 = vmatpush2.xpose.msra.mxu0 0.0
    %246 = vmatprep.subr.mxu0 0.0
    %247 = vmatpush2.xpose.msra.mxu0 0.0
    %248 = vmatprep.subr.mxu0 0.0
    %249 = vmatpush2.xpose.msra.mxu0 0.0
    %250 = vmatprep.subr.mxu0 0.0
    %251 = vmatpush2.xpose.msra.mxu0 0.0
    %252 = vmatprep.subr.mxu0 0.0
    %253 = vmatpush2.xpose.msra.mxu0 0.0
    %254 = vmatprep.subr.mxu0 0.0
    %255 = vmatpush2.xpose.msra.mxu0 0.0
    %256 = vmatprep.subr.mxu0 0.0
    %257 = vmatpush2.xpose.msra.mxu0 0.0
    %258 = vmatprep.subr.mxu0 0.0
    %259 = vmatpush2.xpose.msra.mxu0 0.0
    %260 = vmatprep.subr.mxu0 0.0
    %261 = vmatpush2.xpose.msra.mxu0 0.0
    %262 = vmatprep.subr.mxu0 0.0
    %263 = vmatpush2.xpose.msra.mxu0 0.0
    %264 = vmatprep.subr.mxu0 0.0
    %265 = vmatpush2.xpose.msra.mxu0 0.0
    %266 = vmatprep.subr.mxu0 0.0
    %267 = vmatpush2.xpose.msra.mxu0 0.0
    %268 = vmatprep.mubr.f32.mxu0 %v135
    %269 = vmatmul.mubr.f32.gmra.mxu0 %v127
    %v270 = vpop.f32.mrf.mxu0
    %v271 = vadd.f32 %v114, %v270
    %v272 = vpop.f32.mrf.mxu0
    %273 = vdwg.mxu0
    %274 = vmatprep.subr.mxu0 0.0
    %275 = vmatpush1.xpose.msra.mxu0 0.0
    %276 = vmatprep.subr.mxu0 0.0
    %277 = vmatpush1.xpose.msra.mxu0 0.0
    %278 = vmatprep.subr.mxu0 0.0
    %279 = vmatpush1.xpose.msra.mxu0 0.0
    %280 = vmatprep.subr.mxu0 0.0
    %281 = vmatpush1.xpose.msra.mxu0 0.0
    %282 = vmatprep.subr.mxu0 0.0
    %283 = vmatpush1.xpose.msra.mxu0 0.0
    %284 = vmatprep.subr.mxu0 0.0
    %285 = vmatpush1.xpose.msra.mxu0 0.0
    %286 = vmatprep.subr.mxu0 0.0
    %287 = vmatpush1.xpose.msra.mxu0 0.0
    %288 = vmatprep.subr.mxu0 0.0
    %289 = vmatpush1.xpose.msra.mxu0 0.0
    %290 = vmatprep.subr.mxu0 0.0
    %291 = vmatpush1.xpose.msra.mxu0 0.0
    %292 = vmatprep.subr.mxu0 0.0
    %293 = vmatpush1.xpose.msra.mxu0 0.0
    %294 = vmatprep.subr.mxu0 0.0
    %295 = vmatpush1.xpose.msra.mxu0 0.0
    %296 = vmatprep.subr.mxu0 0.0
    %297 = vmatpush1.xpose.msra.mxu0 0.0
    %298 = vmatprep.subr.mxu0 %v96
    %299 = vmatpush1.xpose.msra.mxu0 %v95
    %300 = vmatprep.subr.mxu0 %v80
    %301 = vmatpush1.xpose.msra.mxu0 %v79
    %302 = vmatprep.subr.mxu0 %v64
    %303 = vmatpush1.xpose.msra.mxu0 %v63
    %304 = vmatprep.subr.mxu0 %v48
    %305 = vmatpush1.xpose.msra.mxu0 %v47
    %306 = vmatprep.subr.mxu0 0.0
    %307 = vmatpush2.xpose.msra.mxu0 0.0
    %308 = vmatprep.subr.mxu0 0.0
    %309 = vmatpush2.xpose.msra.mxu0 0.0
    %310 = vmatprep.subr.mxu0 0.0
    %311 = vmatpush2.xpose.msra.mxu0 0.0
    %312 = vmatprep.subr.mxu0 0.0
    %313 = vmatpush2.xpose.msra.mxu0 0.0
    %314 = vmatprep.subr.mxu0 0.0
    %315 = vmatpush2.xpose.msra.mxu0 0.0
    %316 = vmatprep.subr.mxu0 0.0
    %317 = vmatpush2.xpose.msra.mxu0 0.0
    %318 = vmatprep.subr.mxu0 0.0
    %319 = vmatpush2.xpose.msra.mxu0 0.0
    %320 = vmatprep.subr.mxu0 0.0
    %321 = vmatpush2.xpose.msra.mxu0 0.0
    %322 = vmatprep.subr.mxu0 0.0
    %323 = vmatpush2.xpose.msra.mxu0 0.0
    %324 = vmatprep.subr.mxu0 0.0
    %325 = vmatpush2.xpose.msra.mxu0 0.0
    %326 = vmatprep.subr.mxu0 0.0
    %327 = vmatpush2.xpose.msra.mxu0 0.0
    %328 = vmatprep.subr.mxu0 0.0
    %329 = vmatpush2.xpose.msra.mxu0 0.0
    %330 = vmatprep.subr.mxu0 0.0
    %331 = vmatpush2.xpose.msra.mxu0 0.0
    %332 = vmatprep.subr.mxu0 0.0
    %333 = vmatpush2.xpose.msra.mxu0 0.0
    %334 = vmatprep.subr.mxu0 0.0
    %335 = vmatpush2.xpose.msra.mxu0 0.0
    %336 = vmatprep.subr.mxu0 0.0
    %337 = vmatpush2.xpose.msra.mxu0 0.0
    %338 = vmatprep.mubr.f32.mxu0 %v136
    %339 = vmatmul.mubr.f32.gmra.mxu0 %v134
    %v340 = vpop.f32.mrf.mxu0
    %v341 = vadd.f32 %v271, %v340
    %v342 = vpop.f32.mrf.mxu0
    %343 = vdwg.mxu0
    %344 = vmatprep.subr.mxu0 0.0
    %345 = vmatpush1.xpose.msra.mxu0 0.0
    %346 = vmatprep.subr.mxu0 0.0
    %347 = vmatpush1.xpose.msra.mxu0 0.0
    %348 = vmatprep.subr.mxu0 0.0
    %349 = vmatpush1.xpose.msra.mxu0 0.0
    %350 = vmatprep.subr.mxu0 0.0
    %351 = vmatpush1.xpose.msra.mxu0 0.0
    %352 = vmatprep.subr.mxu0 0.0
    %353 = vmatpush1.xpose.msra.mxu0 0.0
    %354 = vmatprep.subr.mxu0 0.0
    %355 = vmatpush1.xpose.msra.mxu0 0.0
    %356 = vmatprep.subr.mxu0 0.0
    %357 = vmatpush1.xpose.msra.mxu0 0.0
    %358 = vmatprep.subr.mxu0 0.0
    %359 = vmatpush1.xpose.msra.mxu0 0.0
    %360 = vmatprep.subr.mxu0 0.0
    %361 = vmatpush1.xpose.msra.mxu0 0.0
    %362 = vmatprep.subr.mxu0 0.0
    %363 = vmatpush1.xpose.msra.mxu0 0.0
    %364 = vmatprep.subr.mxu0 0.0
    %365 = vmatpush1.xpose.msra.mxu0 0.0
    %366 = vmatprep.subr.mxu0 0.0
    %367 = vmatpush1.xpose.msra.mxu0 0.0
    %368 = vmatprep.subr.mxu0 %v98
    %369 = vmatpush1.xpose.msra.mxu0 %v97
    %370 = vmatprep.subr.mxu0 %v82
    %371 = vmatpush1.xpose.msra.mxu0 %v81
    %372 = vmatprep.subr.mxu0 %v66
    %373 = vmatpush1.xpose.msra.mxu0 %v65
    %374 = vmatprep.subr.mxu0 %v50
    %375 = vmatpush1.xpose.msra.mxu0 %v49
    %376 = vmatprep.subr.mxu0 0.0
    %377 = vmatpush2.xpose.msra.mxu0 0.0
    %378 = vmatprep.subr.mxu0 0.0
    %379 = vmatpush2.xpose.msra.mxu0 0.0
    %380 = vmatprep.subr.mxu0 0.0
    %381 = vmatpush2.xpose.msra.mxu0 0.0
    %382 = vmatprep.subr.mxu0 0.0
    %383 = vmatpush2.xpose.msra.mxu0 0.0
    %384 = vmatprep.subr.mxu0 0.0
    %385 = vmatpush2.xpose.msra.mxu0 0.0
    %386 = vmatprep.subr.mxu0 0.0
    %387 = vmatpush2.xpose.msra.mxu0 0.0
    %388 = vmatprep.subr.mxu0 0.0
    %389 = vmatpush2.xpose.msra.mxu0 0.0
    %390 = vmatprep.subr.mxu0 0.0
    %391 = vmatpush2.xpose.msra.mxu0 0.0
    %392 = vmatprep.subr.mxu0 0.0
    %393 = vmatpush2.xpose.msra.mxu0 0.0
    %394 = vmatprep.subr.mxu0 0.0
    %395 = vmatpush2.xpose.msra.mxu0 0.0
    %396 = vmatprep.subr.mxu0 0.0
    %397 = vmatpush2.xpose.msra.mxu0 0.0
    %398 = vmatprep.subr.mxu0 0.0
    %399 = vmatpush2.xpose.msra.mxu0 0.0
    %400 = vmatprep.subr.mxu0 0.0
    %401 = vmatpush2.xpose.msra.mxu0 0.0
    %402 = vmatprep.subr.mxu0 0.0
    %403 = vmatpush2.xpose.msra.mxu0 0.0
    %404 = vmatprep.subr.mxu0 0.0
    %405 = vmatpush2.xpose.msra.mxu0 0.0
    %406 = vmatprep.subr.mxu0 0.0
    %407 = vmatpush2.xpose.msra.mxu0 0.0
    %408 = vmatprep.mubr.f32.mxu0 %v152
    %409 = vmatmul.mubr.f32.gmra.mxu0 %v144
    %v410 = vpop.f32.mrf.mxu0
    %v411 = vadd.f32 %v341, %v410
    %v412 = vpop.f32.mrf.mxu0
    %413 = vdwg.mxu0
    %414 = vmatprep.subr.mxu0 0.0
    %415 = vmatpush1.xpose.msra.mxu0 0.0
    %416 = vmatprep.subr.mxu0 0.0
    %417 = vmatpush1.xpose.msra.mxu0 0.0
    %418 = vmatprep.subr.mxu0 0.0
    %419 = vmatpush1.xpose.msra.mxu0 0.0
    %420 = vmatprep.subr.mxu0 0.0
    %421 = vmatpush1.xpose.msra.mxu0 0.0
    %422 = vmatprep.subr.mxu0 0.0
    %423 = vmatpush1.xpose.msra.mxu0 0.0
    %424 = vmatprep.subr.mxu0 0.0
    %425 = vmatpush1.xpose.msra.mxu0 0.0
    %426 = vmatprep.subr.mxu0 0.0
    %427 = vmatpush1.xpose.msra.mxu0 0.0
    %428 = vmatprep.subr.mxu0 0.0
    %429 = vmatpush1.xpose.msra.mxu0 0.0
    %430 = vmatprep.subr.mxu0 0.0
    %431 = vmatpush1.xpose.msra.mxu0 0.0
    %432 = vmatprep.subr.mxu0 0.0
    %433 = vmatpush1.xpose.msra.mxu0 0.0
    %434 = vmatprep.subr.mxu0 0.0
    %435 = vmatpush1.xpose.msra.mxu0 0.0
    %436 = vmatprep.subr.mxu0 0.0
    %437 = vmatpush1.xpose.msra.mxu0 0.0
    %438 = vmatprep.subr.mxu0 %v100
    %439 = vmatpush1.xpose.msra.mxu0 %v99
    %440 = vmatprep.subr.mxu0 %v84
    %441 = vmatpush1.xpose.msra.mxu0 %v83
    %442 = vmatprep.subr.mxu0 %v68
    %443 = vmatpush1.xpose.msra.mxu0 %v67
    %444 = vmatprep.subr.mxu0 %v52
    %445 = vmatpush1.xpose.msra.mxu0 %v51
    %446 = vmatprep.subr.mxu0 0.0
    %447 = vmatpush2.xpose.msra.mxu0 0.0
    %448 = vmatprep.subr.mxu0 0.0
    %449 = vmatpush2.xpose.msra.mxu0 0.0
    %450 = vmatprep.subr.mxu0 0.0
    %451 = vmatpush2.xpose.msra.mxu0 0.0
    %452 = vmatprep.subr.mxu0 0.0
    %453 = vmatpush2.xpose.msra.mxu0 0.0
    %454 = vmatprep.subr.mxu0 0.0
    %455 = vmatpush2.xpose.msra.mxu0 0.0
    %456 = vmatprep.subr.mxu0 0.0
    %457 = vmatpush2.xpose.msra.mxu0 0.0
    %458 = vmatprep.subr.mxu0 0.0
    %459 = vmatpush2.xpose.msra.mxu0 0.0
    %460 = vmatprep.subr.mxu0 0.0
    %461 = vmatpush2.xpose.msra.mxu0 0.0
    %462 = vmatprep.subr.mxu0 0.0
    %463 = vmatpush2.xpose.msra.mxu0 0.0
    %464 = vmatprep.subr.mxu0 0.0
    %465 = vmatpush2.xpose.msra.mxu0 0.0
    %466 = vmatprep.subr.mxu0 0.0
    %467 = vmatpush2.xpose.msra.mxu0 0.0
    %468 = vmatprep.subr.mxu0 0.0
    %469 = vmatpush2.xpose.msra.mxu0 0.0
    %470 = vmatprep.subr.mxu0 0.0
    %471 = vmatpush2.xpose.msra.mxu0 0.0
    %472 = vmatprep.subr.mxu0 0.0
    %473 = vmatpush2.xpose.msra.mxu0 0.0
    %474 = vmatprep.subr.mxu0 0.0
    %475 = vmatpush2.xpose.msra.mxu0 0.0
    %476 = vmatprep.subr.mxu0 0.0
    %477 = vmatpush2.xpose.msra.mxu0 0.0
    %478 = vmatprep.mubr.f32.mxu0 %v153
    %479 = vmatmul.mubr.f32.gmra.mxu0 %v151
    %v480 = vpop.f32.mrf.mxu0
    %v481 = vadd.f32 %v411, %v480
    %v482 = vpop.f32.mrf.mxu0
    %483 = vdwg.mxu0
    %484 = vmatprep.subr.mxu0 0.0
    %485 = vmatpush1.xpose.msra.mxu0 0.0
    %486 = vmatprep.subr.mxu0 0.0
    %487 = vmatpush1.xpose.msra.mxu0 0.0
    %488 = vmatprep.subr.mxu0 0.0
    %489 = vmatpush1.xpose.msra.mxu0 0.0
    %490 = vmatprep.subr.mxu0 0.0
    %491 = vmatpush1.xpose.msra.mxu0 0.0
    %492 = vmatprep.subr.mxu0 0.0
    %493 = vmatpush1.xpose.msra.mxu0 0.0
    %494 = vmatprep.subr.mxu0 0.0
    %495 = vmatpush1.xpose.msra.mxu0 0.0
    %496 = vmatprep.subr.mxu0 0.0
    %497 = vmatpush1.xpose.msra.mxu0 0.0
    %498 = vmatprep.subr.mxu0 0.0
    %499 = vmatpush1.xpose.msra.mxu0 0.0
    %500 = vmatprep.subr.mxu0 0.0
    %501 = vmatpush1.xpose.msra.mxu0 0.0
    %502 = vmatprep.subr.mxu0 0.0
    %503 = vmatpush1.xpose.msra.mxu0 0.0
    %504 = vmatprep.subr.mxu0 0.0
    %505 = vmatpush1.xpose.msra.mxu0 0.0
    %506 = vmatprep.subr.mxu0 0.0
    %507 = vmatpush1.xpose.msra.mxu0 0.0
    %508 = vmatprep.subr.mxu0 %v102
    %509 = vmatpush1.xpose.msra.mxu0 %v101
    %510 = vmatprep.subr.mxu0 %v86
    %511 = vmatpush1.xpose.msra.mxu0 %v85
    %512 = vmatprep.subr.mxu0 %v70
    %513 = vmatpush1.xpose.msra.mxu0 %v69
    %514 = vmatprep.subr.mxu0 %v54
    %515 = vmatpush1.xpose.msra.mxu0 %v53
    %516 = vmatprep.subr.mxu0 0.0
    %517 = vmatpush2.xpose.msra.mxu0 0.0
    %518 = vmatprep.subr.mxu0 0.0
    %519 = vmatpush2.xpose.msra.mxu0 0.0
    %520 = vmatprep.subr.mxu0 0.0
    %521 = vmatpush2.xpose.msra.mxu0 0.0
    %522 = vmatprep.subr.mxu0 0.0
    %523 = vmatpush2.xpose.msra.mxu0 0.0
    %524 = vmatprep.subr.mxu0 0.0
    %525 = vmatpush2.xpose.msra.mxu0 0.0
    %526 = vmatprep.subr.mxu0 0.0
    %527 = vmatpush2.xpose.msra.mxu0 0.0
    %528 = vmatprep.subr.mxu0 0.0
    %529 = vmatpush2.xpose.msra.mxu0 0.0
    %530 = vmatprep.subr.mxu0 0.0
    %531 = vmatpush2.xpose.msra.mxu0 0.0
    %532 = vmatprep.subr.mxu0 0.0
    %533 = vmatpush2.xpose.msra.mxu0 0.0
    %534 = vmatprep.subr.mxu0 0.0
    %535 = vmatpush2.xpose.msra.mxu0 0.0
    %536 = vmatprep.subr.mxu0 0.0
    %537 = vmatpush2.xpose.msra.mxu0 0.0
    %538 = vmatprep.subr.mxu0 0.0
    %539 = vmatpush2.xpose.msra.mxu0 0.0
    %540 = vmatprep.subr.mxu0 0.0
    %541 = vmatpush2.xpose.msra.mxu0 0.0
    %542 = vmatprep.subr.mxu0 0.0
    %543 = vmatpush2.xpose.msra.mxu0 0.0
    %544 = vmatprep.subr.mxu0 0.0
    %545 = vmatpush2.xpose.msra.mxu0 0.0
    %546 = vmatprep.subr.mxu0 0.0
    %547 = vmatpush2.xpose.msra.mxu0 0.0
    %548 = vmatprep.mubr.f32.mxu0 %v169
    %549 = vmatmul.mubr.f32.gmra.mxu0 %v161
    %v550 = vpop.f32.mrf.mxu0
    %v551 = vadd.f32 %v481, %v550
    %v552 = vpop.f32.mrf.mxu0
    %553 = vdwg.mxu0
    %554 = vmatprep.subr.mxu0 0.0
    %555 = vmatpush1.xpose.msra.mxu0 0.0
    %556 = vmatprep.subr.mxu0 0.0
    %557 = vmatpush1.xpose.msra.mxu0 0.0
    %558 = vmatprep.subr.mxu0 0.0
    %559 = vmatpush1.xpose.msra.mxu0 0.0
    %560 = vmatprep.subr.mxu0 0.0
    %561 = vmatpush1.xpose.msra.mxu0 0.0
    %562 = vmatprep.subr.mxu0 0.0
    %563 = vmatpush1.xpose.msra.mxu0 0.0
    %564 = vmatprep.subr.mxu0 0.0
    %565 = vmatpush1.xpose.msra.mxu0 0.0
    %566 = vmatprep.subr.mxu0 0.0
    %567 = vmatpush1.xpose.msra.mxu0 0.0
    %568 = vmatprep.subr.mxu0 0.0
    %569 = vmatpush1.xpose.msra.mxu0 0.0
    %570 = vmatprep.subr.mxu0 0.0
    %571 = vmatpush1.xpose.msra.mxu0 0.0
    %572 = vmatprep.subr.mxu0 0.0
    %573 = vmatpush1.xpose.msra.mxu0 0.0
    %574 = vmatprep.subr.mxu0 0.0
    %575 = vmatpush1.xpose.msra.mxu0 0.0
    %576 = vmatprep.subr.mxu0 0.0
    %577 = vmatpush1.xpose.msra.mxu0 0.0
    %578 = vmatprep.subr.mxu0 %v104
    %579 = vmatpush1.xpose.msra.mxu0 %v103
    %580 = vmatprep.subr.mxu0 %v88
    %581 = vmatpush1.xpose.msra.mxu0 %v87
    %582 = vmatprep.subr.mxu0 %v72
    %583 = vmatpush1.xpose.msra.mxu0 %v71
    %584 = vmatprep.subr.mxu0 %v56
    %585 = vmatpush1.xpose.msra.mxu0 %v55
    %586 = vmatprep.subr.mxu0 0.0
    %587 = vmatpush2.xpose.msra.mxu0 0.0
    %588 = vmatprep.subr.mxu0 0.0
    %589 = vmatpush2.xpose.msra.mxu0 0.0
    %590 = vmatprep.subr.mxu0 0.0
    %591 = vmatpush2.xpose.msra.mxu0 0.0
    %592 = vmatprep.subr.mxu0 0.0
    %593 = vmatpush2.xpose.msra.mxu0 0.0
    %594 = vmatprep.subr.mxu0 0.0
    %595 = vmatpush2.xpose.msra.mxu0 0.0
    %596 = vmatprep.subr.mxu0 0.0
    %597 = vmatpush2.xpose.msra.mxu0 0.0
    %598 = vmatprep.subr.mxu0 0.0
    %599 = vmatpush2.xpose.msra.mxu0 0.0
    %600 = vmatprep.subr.mxu0 0.0
    %601 = vmatpush2.xpose.msra.mxu0 0.0
    %602 = vmatprep.subr.mxu0 0.0
    %603 = vmatpush2.xpose.msra.mxu0 0.0
    %604 = vmatprep.subr.mxu0 0.0
    %605 = vmatpush2.xpose.msra.mxu0 0.0
    %606 = vmatprep.subr.mxu0 0.0
    %607 = vmatpush2.xpose.msra.mxu0 0.0
    %608 = vmatprep.subr.mxu0 0.0
    %609 = vmatpush2.xpose.msra.mxu0 0.0
    %610 = vmatprep.subr.mxu0 0.0
    %611 = vmatpush2.xpose.msra.mxu0 0.0
    %612 = vmatprep.subr.mxu0 0.0
    %613 = vmatpush2.xpose.msra.mxu0 0.0
    %614 = vmatprep.subr.mxu0 0.0
    %615 = vmatpush2.xpose.msra.mxu0 0.0
    %616 = vmatprep.subr.mxu0 0.0
    %617 = vmatpush2.xpose.msra.mxu0 0.0
    %618 = vmatprep.mubr.f32.mxu0 %v170
    %619 = vmatmul.mubr.f32.gmra.mxu0 %v168
    %v620 = vpop.f32.mrf.mxu0
    %v621 = vadd.f32 %v551, %v620
    %v622 = vpop.f32.mrf.mxu0
    %623 = vdwg.mxu0
    %624 = vmatprep.subr.mxu0 0.0
    %625 = vmatpush1.xpose.msra.mxu0 0.0
    %626 = vmatprep.subr.mxu0 0.0
    %627 = vmatpush1.xpose.msra.mxu0 0.0
    %628 = vmatprep.subr.mxu0 0.0
    %629 = vmatpush1.xpose.msra.mxu0 0.0
    %630 = vmatprep.subr.mxu0 0.0
    %631 = vmatpush1.xpose.msra.mxu0 0.0
    %632 = vmatprep.subr.mxu0 0.0
    %633 = vmatpush1.xpose.msra.mxu0 0.0
    %634 = vmatprep.subr.mxu0 0.0
    %635 = vmatpush1.xpose.msra.mxu0 0.0
    %636 = vmatprep.subr.mxu0 0.0
    %637 = vmatpush1.xpose.msra.mxu0 0.0
    %638 = vmatprep.subr.mxu0 0.0
    %639 = vmatpush1.xpose.msra.mxu0 0.0
    %640 = vmatprep.subr.mxu0 0.0
    %641 = vmatpush1.xpose.msra.mxu0 0.0
    %642 = vmatprep.subr.mxu0 0.0
    %643 = vmatpush1.xpose.msra.mxu0 0.0
    %644 = vmatprep.subr.mxu0 0.0
    %645 = vmatpush1.xpose.msra.mxu0 0.0
    %646 = vmatprep.subr.mxu0 0.0
    %647 = vmatpush1.xpose.msra.mxu0 0.0
    %648 = vmatprep.subr.mxu0 %v106
    %649 = vmatpush1.xpose.msra.mxu0 %v105
    %650 = vmatprep.subr.mxu0 %v90
    %651 = vmatpush1.xpose.msra.mxu0 %v89
    %652 = vmatprep.subr.mxu0 %v74
    %653 = vmatpush1.xpose.msra.mxu0 %v73
    %654 = vmatprep.subr.mxu0 %v58
    %655 = vmatpush1.xpose.msra.mxu0 %v57
    %656 = vmatprep.subr.mxu0 0.0
    %657 = vmatpush2.xpose.msra.mxu0 0.0
    %658 = vmatprep.subr.mxu0 0.0
    %659 = vmatpush2.xpose.msra.mxu0 0.0
    %660 = vmatprep.subr.mxu0 0.0
    %661 = vmatpush2.xpose.msra.mxu0 0.0
    %662 = vmatprep.subr.mxu0 0.0
    %663 = vmatpush2.xpose.msra.mxu0 0.0
    %664 = vmatprep.subr.mxu0 0.0
    %665 = vmatpush2.xpose.msra.mxu0 0.0
    %666 = vmatprep.subr.mxu0 0.0
    %667 = vmatpush2.xpose.msra.mxu0 0.0
    %668 = vmatprep.subr.mxu0 0.0
    %669 = vmatpush2.xpose.msra.mxu0 0.0
    %670 = vmatprep.subr.mxu0 0.0
    %671 = vmatpush2.xpose.msra.mxu0 0.0
    %672 = vmatprep.subr.mxu0 0.0
    %673 = vmatpush2.xpose.msra.mxu0 0.0
    %674 = vmatprep.subr.mxu0 0.0
    %675 = vmatpush2.xpose.msra.mxu0 0.0
    %676 = vmatprep.subr.mxu0 0.0
    %677 = vmatpush2.xpose.msra.mxu0 0.0
    %678 = vmatprep.subr.mxu0 0.0
    %679 = vmatpush2.xpose.msra.mxu0 0.0
    %680 = vmatprep.subr.mxu0 0.0
    %681 = vmatpush2.xpose.msra.mxu0 0.0
    %682 = vmatprep.subr.mxu0 0.0
    %683 = vmatpush2.xpose.msra.mxu0 0.0
    %684 = vmatprep.subr.mxu0 0.0
    %685 = vmatpush2.xpose.msra.mxu0 0.0
    %686 = vmatprep.subr.mxu0 0.0
    %687 = vmatpush2.xpose.msra.mxu0 0.0
    %688 = vmatprep.mubr.f32.mxu0 %v186
    %689 = vmatmul.mubr.f32.gmra.mxu0 %v178
    %v690 = vpop.f32.mrf.mxu0
    %v691 = vadd.f32 %v621, %v690
    %v692 = vpop.f32.mrf.mxu0
    %693 = vdwg.mxu0
    %694 = vmatprep.subr.mxu0 0.0
    %695 = vmatpush1.xpose.msra.mxu0 0.0
    %696 = vmatprep.subr.mxu0 0.0
    %697 = vmatpush1.xpose.msra.mxu0 0.0
    %698 = vmatprep.subr.mxu0 0.0
    %699 = vmatpush1.xpose.msra.mxu0 0.0
    %700 = vmatprep.subr.mxu0 0.0
    %701 = vmatpush1.xpose.msra.mxu0 0.0
    %702 = vmatprep.subr.mxu0 0.0
    %703 = vmatpush1.xpose.msra.mxu0 0.0
    %704 = vmatprep.subr.mxu0 0.0
    %705 = vmatpush1.xpose.msra.mxu0 0.0
    %706 = vmatprep.subr.mxu0 0.0
    %707 = vmatpush1.xpose.msra.mxu0 0.0
    %708 = vmatprep.subr.mxu0 0.0
    %709 = vmatpush1.xpose.msra.mxu0 0.0
    %710 = vmatprep.subr.mxu0 0.0
    %711 = vmatpush1.xpose.msra.mxu0 0.0
    %712 = vmatprep.subr.mxu0 0.0
    %713 = vmatpush1.xpose.msra.mxu0 0.0
    %714 = vmatprep.subr.mxu0 0.0
    %715 = vmatpush1.xpose.msra.mxu0 0.0
    %716 = vmatprep.subr.mxu0 0.0
    %717 = vmatpush1.xpose.msra.mxu0 0.0
    %718 = vmatprep.subr.mxu0 %v108
    %719 = vmatpush1.xpose.msra.mxu0 %v107
    %720 = vmatprep.subr.mxu0 %v92
    %721 = vmatpush1.xpose.msra.mxu0 %v91
    %722 = vmatprep.subr.mxu0 %v76
    %723 = vmatpush1.xpose.msra.mxu0 %v75
    %724 = vmatprep.subr.mxu0 %v60
    %725 = vmatpush1.xpose.msra.mxu0 %v59
    %726 = vmatprep.subr.mxu0 0.0
    %727 = vmatpush2.xpose.msra.mxu0 0.0
    %728 = vmatprep.subr.mxu0 0.0
    %729 = vmatpush2.xpose.msra.mxu0 0.0
    %730 = vmatprep.subr.mxu0 0.0
    %731 = vmatpush2.xpose.msra.mxu0 0.0
    %732 = vmatprep.subr.mxu0 0.0
    %733 = vmatpush2.xpose.msra.mxu0 0.0
    %734 = vmatprep.subr.mxu0 0.0
    %735 = vmatpush2.xpose.msra.mxu0 0.0
    %736 = vmatprep.subr.mxu0 0.0
    %737 = vmatpush2.xpose.msra.mxu0 0.0
    %738 = vmatprep.subr.mxu0 0.0
    %739 = vmatpush2.xpose.msra.mxu0 0.0
    %740 = vmatprep.subr.mxu0 0.0
    %741 = vmatpush2.xpose.msra.mxu0 0.0
    %742 = vmatprep.subr.mxu0 0.0
    %743 = vmatpush2.xpose.msra.mxu0 0.0
    %744 = vmatprep.subr.mxu0 0.0
    %745 = vmatpush2.xpose.msra.mxu0 0.0
    %746 = vmatprep.subr.mxu0 0.0
    %747 = vmatpush2.xpose.msra.mxu0 0.0
    %748 = vmatprep.subr.mxu0 0.0
    %749 = vmatpush2.xpose.msra.mxu0 0.0
    %750 = vmatprep.subr.mxu0 0.0
    %751 = vmatpush2.xpose.msra.mxu0 0.0
    %752 = vmatprep.subr.mxu0 0.0
    %753 = vmatpush2.xpose.msra.mxu0 0.0
    %754 = vmatprep.subr.mxu0 0.0
    %755 = vmatpush2.xpose.msra.mxu0 0.0
    %756 = vmatprep.subr.mxu0 0.0
    %757 = vmatpush2.xpose.msra.mxu0 0.0
    %758 = vmatprep.mubr.f32.mxu0 %v187
    %759 = vmatmul.mubr.f32.gmra.mxu0 %v185
    %v760 = vpop.f32.mrf.mxu0
    %v761 = vadd.f32 %v691, %v760
    %v762 = vpop.f32.mrf.mxu0
    %763 = vdwg.mxu0
    %vm764 = vcmask 246784
    %765 = vst.msk [vmem:[#allocation7] sm:$0x3] %vm764, %v761
    // Predicated region
    $region22: #{tpu_custom_call.1} parent=1 // pred_check
      _
    $region23: #{tpu_custom_call.1} parent=1 // pred_check_branch
      %767 = sbr.rel (0) target = $region25
    $region24: #{tpu_custom_call.1} parent=1 // pred_region
      %s769 = ssub.s32 32, 32
      %770 = vsyncadd [#allocation4], %s769
      %s772 = sshll.u32 [#allocation7], 4
      %s773 = int_to_ptr.vmem [resolvable:$true] %s772
      %775 = dma.vmem_to_hbm [thread:$0]  %s773, 32, %s3, [#allocation4]
    $region25: #{tpu_custom_call.1} parent=1 // pred_fallthru
      _
    // Predicated region
    $region26: #{tpu_custom_call.1} parent=1 // pred_check
      _
    $region27: #{tpu_custom_call.1} parent=1 // pred_check_branch
      %777 = sbr.rel (0) target = $region29
    $region28: #{tpu_custom_call.1} parent=1 // pred_region
      %778 = dma.done [#allocation4], 32
    $region29: #{tpu_custom_call.1} parent=1 // pred_fallthru
      _
    %779 = vsyncpa [#allocation3], 1
    %780 = vsyncpa [#allocation6], 1
    %781 = vsyncpa [#allocation4], 1

</llo_original>
